<compile_context>
chip_gen: v7x
topology: tpu7x:2x2x1
jax: 0.10.0
libtpu: 0.0.40
codegen_flags: <defaults>
</compile_context>

<pallas_src>
import jax
import jax.numpy as jnp
from jax.experimental import pallas as pl
from jax.experimental.pallas import tpu as pltpu


def linear_kernel(x_ref, w_ref, b_ref, o_ref):
    # MXU matmul with f32 accumulation, then broadcast bias add on the VPU.
    acc = jnp.dot(x_ref[...], w_ref[...], preferred_element_type=jnp.float32)
    o_ref[...] = (acc + b_ref[...]).astype(o_ref.dtype)


def probe_forward(x, w_t, b, *, block_m=512):
    """Linear probe forward: x @ W^T + b.

    x:   (B, Fin)     activations (f32)
    w_t: (Fin, Fout)  weight, already transposed from PyTorch's (Fout, Fin)
    b:   (1, Fout)    bias
    returns (B, Fout) f32
    """
    B, Fin = x.shape
    Fout = w_t.shape[1]

    # Single block if the batch fits; otherwise 512-row tiles (multiple of 8)
    # with a masked partial last block — no batch padding, no copies.
    tm = B if B <= block_m else block_m
    grid = (pl.cdiv(B, tm),)

    cost = pl.CostEstimate(
        flops=2 * B * Fin * Fout,
        transcendentals=0,
        bytes_accessed=4 * (B * Fin + Fin * Fout + Fout + B * Fout),
    )

    return pl.pallas_call(
        linear_kernel,
        out_shape=jax.ShapeDtypeStruct((B, Fout), x.dtype),
        grid=grid,
        in_specs=[
            pl.BlockSpec((tm, Fin), lambda i: (i, 0)),
            # Constant blocks: fetched once, single-buffered (no wasted VMEM).
            pl.BlockSpec((Fin, Fout), lambda i: (0, 0),
                         pipeline_mode=pl.Buffered(1)),
            pl.BlockSpec((1, Fout), lambda i: (0, 0),
                         pipeline_mode=pl.Buffered(1)),
        ],
        out_specs=pl.BlockSpec((tm, Fout), lambda i: (i, 0)),
        compiler_params=pltpu.CompilerParams(
            dimension_semantics=("parallel",),
        ),
        cost_estimate=cost,
    )(x, w_t, b)


if __name__ == "__main__":
    input_features = 256
    output_features = 255
    batch = 8

    key = jax.random.PRNGKey(0)
    kx, kw, kb = jax.random.split(key, 3)

    # Deterministic init mimicking nn.Linear's U(-1/sqrt(fan_in), 1/sqrt(fan_in)).
    bound = 1.0 / jnp.sqrt(jnp.float32(input_features))
    # PyTorch weight is (out, in); store the transposed (in, out) layout so the
    # kernel computes x @ W^T directly.  Done once at init, never per call.
    w_t = jax.random.uniform(
        kw, (input_features, output_features), jnp.float32, -bound, bound
    )
    b = jax.random.uniform(
        kb, (1, output_features), jnp.float32, -bound, bound
    )
    x = jax.random.normal(kx, (batch, input_features), jnp.float32)

    out = probe_forward(x, w_t, b)
    jax.block_until_ready(out)
    assert out.shape == (batch, output_features)
    assert out.dtype == jnp.float32

    # Reference (plain JAX). Tolerance covers MXU pass-decomposition differences
    # between the kernel's and XLA's default-precision f32 matmuls.
    ref = x @ w_t + b
    assert jnp.allclose(out, ref, atol=2e-2, rtol=2e-2), float(
        jnp.max(jnp.abs(out - ref))
    )

    # Second small, non-multiple-of-8 batch exercises the full-dim block path.
    x2 = jax.random.normal(jax.random.PRNGKey(1), (12, input_features), jnp.float32)
    out2 = probe_forward(x2, w_t, b)
    jax.block_until_ready(out2)
    assert out2.shape == (12, output_features)
    assert jnp.allclose(out2, x2 @ w_t + b, atol=2e-2, rtol=2e-2)

    print("KERNEL_OK")
</pallas_src>

<mosaic_0001>
module attributes {stable_mosaic.version = 11 : i64} {
  func.func @linear_kernel(%arg0: i32, %arg1: memref<8x256xf32, #tpu.memory_space<vmem>>, %arg2: memref<256x255xf32, #tpu.memory_space<vmem>>, %arg3: memref<1x255xf32, #tpu.memory_space<vmem>>, %arg4: memref<8x255xf32, #tpu.memory_space<vmem>>) attributes {dimension_semantics = [#tpu.dimension_semantics<parallel>], iteration_bounds = array<i64: 1>, scalar_prefetch = 0 : i64, scratch_operands = 0 : i64, tpu.core_type = #tpu.core_type<tc>, window_params = [{transform_indices = @transform_0, window_bounds = array<i64: 8, 256>}, {pipeline_mode = #tpu.pipeline_mode<synchronous>, transform_indices = @transform_1, window_bounds = array<i64: 256, 255>}, {pipeline_mode = #tpu.pipeline_mode<synchronous>, transform_indices = @transform_2, window_bounds = array<i64: 1, 255>}, {transform_indices = @transform_3, window_bounds = array<i64: 8, 255>}]} {
    %c0 = arith.constant 0 : index
    %c0_0 = arith.constant 0 : index
    %0 = vector.load %arg1[%c0, %c0_0] : memref<8x256xf32, #tpu.memory_space<vmem>>, vector<8x256xf32>
    %c0_1 = arith.constant 0 : index
    %c0_2 = arith.constant 0 : index
    %1 = vector.load %arg2[%c0_1, %c0_2] : memref<256x255xf32, #tpu.memory_space<vmem>>, vector<256x255xf32>
    %cst = arith.constant dense<0.000000e+00> : vector<8x255xf32>
    %2 = tpu.matmul %0, %1, %cst {dimension_numbers = #tpu.dot_dimension_numbers<[1], [0], [0], [1], [0, 0, 1, 1], [], []>} : vector<8x256xf32>, vector<256x255xf32>, vector<8x255xf32> -> vector<8x255xf32>
    %c0_3 = arith.constant 0 : index
    %c0_4 = arith.constant 0 : index
    %3 = vector.load %arg3[%c0_3, %c0_4] : memref<1x255xf32, #tpu.memory_space<vmem>>, vector<1x255xf32>
    %4 = vector.broadcast %3 : vector<1x255xf32> to vector<8x255xf32>
    %5 = arith.addf %2, %4 : vector<8x255xf32>
    %c0_5 = arith.constant 0 : index
    %c0_6 = arith.constant 0 : index
    %6 = vector.load %arg4[%c0_5, %c0_6] : memref<8x255xf32, #tpu.memory_space<vmem>>, vector<8x255xf32>
    tpu.vector_store %arg4[%c0_5, %c0_6], %5 {strides = array<i32>} : memref<8x255xf32, #tpu.memory_space<vmem>>, vector<8x255xf32>,
    return
  }
  func.func @transform_0(%arg0: i32) -> (i32, i32) {
    %c0_i32 = arith.constant 0 : i32
    %c0_i32_0 = arith.constant 0 : i32
    return %arg0, %c0_i32 : i32, i32
  }
  func.func @transform_1(%arg0: i32) -> (i32, i32) {
    %c0_i32 = arith.constant 0 : i32
    %c0_i32_0 = arith.constant 0 : i32
    %c0_i32_1 = arith.constant 0 : i32
    return %c0_i32, %c0_i32_0 : i32, i32
  }
  func.func @transform_2(%arg0: i32) -> (i32, i32) {
    %c0_i32 = arith.constant 0 : i32
    %c0_i32_0 = arith.constant 0 : i32
    %c0_i32_1 = arith.constant 0 : i32
    return %c0_i32, %c0_i32_0 : i32, i32
  }
  func.func @transform_3(%arg0: i32) -> (i32, i32) {
    %c0_i32 = arith.constant 0 : i32
    %c0_i32_0 = arith.constant 0 : i32
    return %arg0, %c0_i32 : i32, i32
  }
}

</mosaic_0001>

<llo_original>
// kernel: tpu_custom_call.1
$region0: #{tpu_custom_call.1}
  #allocation0 [shape = 'u32[]', space=smem, size = 0x4, offset = 0x4, fixed_abs, tag = 'smem constant byte address 0x4 - core index']
  #allocation1 [shape = 'u32[144,128]{1,0:T(1,128)}', space=vmem, size = 0x12000, scoped, tag = 'internal scratch']
  %s0 = inlined_call_operand.hbm [shape: f32[8,256], index: 0, kind: input, shape index: {}]
  %s1 = inlined_call_operand.hbm [shape: f32[256,255], index: 1, kind: input, shape index: {}]
  %s2 = inlined_call_operand.vmem [shape: f32[1,255], index: 2, kind: input, shape index: {}]
  %s3 = inlined_call_operand.hbm [shape: f32[8,255], index: 3, kind: output, shape index: {}]
  %s4 = sld [smem:[#allocation0]]
  $region30: #{tpu_custom_call.1} parent=0
    _
  %s6 = ssub.s32 1, %s4
  %s7 = scalar_select 0, %s6, %s4
  $region1: #{tpu_custom_call.1} parent=0
    #allocation2 [shape = 'u8[8192]{0}', space=vmem, size = 0x2000, scoped, tag = 'input window, operand 0, single buffered']
    #allocation3 [shape = 's32[1]{0}', space=sflag, size = 0x4, scoped, tag = 'scoped memory for tpu_custom_call.1']
    #allocation4 [shape = 's32[1]{0}', space=sflag, size = 0x4, scoped, tag = 'scoped memory for tpu_custom_call.1']
    #allocation5 [shape = 'u8[262144]{0}', space=vmem, size = 0x40000, scoped, tag = 'input window, operand 1, single buffered']
    #allocation6 [shape = 's32[1]{0}', space=sflag, size = 0x4, scoped, tag = 'scoped memory for tpu_custom_call.1']
    #allocation7 [shape = 'u8[8192]{0}', space=vmem, size = 0x2000, scoped, tag = 'output window, operand 0, single buffered']
    %8 = vsyncpa [#allocation3], 0
    %9 = vsyncpa [#allocation6], 0
    %10 = vsyncpa [#allocation4], 0
    // Predicated region
    $region2: #{tpu_custom_call.1} parent=1 // pred_check
      _
    $region3: #{tpu_custom_call.1} parent=1 // pred_check_branch
      %12 = sbr.rel (0) target = $region5
    $region4: #{tpu_custom_call.1} parent=1 // pred_region
      %s14 = ssub.s32 256, 256
      %15 = vsyncadd [#allocation3], %s14
      %s17 = sshll.u32 [#allocation2], 4
      %s18 = int_to_ptr.vmem [resolvable:$true] %s17
      %20 = dma.hbm_to_vmem [thread:$0]  %s0, 256, %s18, [#allocation3]
    $region5: #{tpu_custom_call.1} parent=1 // pred_fallthru
      _
    // Predicated region
    $region6: #{tpu_custom_call.1} parent=1 // pred_check
      _
    $region7: #{tpu_custom_call.1} parent=1 // pred_check_branch
      %22 = sbr.rel (0) target = $region9
    $region8: #{tpu_custom_call.1} parent=1 // pred_region
      %s24 = ssub.s32 8192, 8192
      %25 = vsyncadd [#allocation6], %s24
      %s26 = sshll.u32 [#allocation5], 4
      %s27 = int_to_ptr.vmem [resolvable:$true] %s26
      %32 = dma.hbm_to_vmem [thread:$0]  %s1, 8192, %s27, [#allocation6], 256, 256, 16
    $region9: #{tpu_custom_call.1} parent=1 // pred_fallthru
      _
    // Predicated region
    $region10: #{tpu_custom_call.1} parent=1 // pred_check
      _
    $region11: #{tpu_custom_call.1} parent=1 // pred_check_branch
      %34 = sbr.rel (0) target = $region13
    $region12: #{tpu_custom_call.1} parent=1 // pred_region
      _
    $region13: #{tpu_custom_call.1} parent=1 // pred_fallthru
      _
    // Predicated region
    $region14: #{tpu_custom_call.1} parent=1 // pred_check
      _
    $region15: #{tpu_custom_call.1} parent=1 // pred_check_branch
      %36 = sbr.rel (0) target = $region17
    $region16: #{tpu_custom_call.1} parent=1 // pred_region
      %37 = dma.done [#allocation3], 256
    $region17: #{tpu_custom_call.1} parent=1 // pred_fallthru
      _
    // Predicated region
    $region18: #{tpu_custom_call.1} parent=1 // pred_check
      _
    $region19: #{tpu_custom_call.1} parent=1 // pred_check_branch
      %39 = sbr.rel (0) target = $region21
    $region20: #{tpu_custom_call.1} parent=1 // pred_region
      %40 = dma.done [#allocation6], 8192
    $region21: #{tpu_custom_call.1} parent=1 // pred_fallthru
      _
    %v41 = vld [vmem:[#allocation2] sm:$0xff]
    %v42 = vld [vmem:[#allocation2 + $0x8] sm:$0xff]
    %v43 = vld [vmem:[#allocation5] sm:$0xff]
    %v44 = vld [vmem:[#allocation5 + $0x8] sm:$0xff]
    %v45 = vld [vmem:[#allocation5 + $0x10] sm:$0xff]
    %v46 = vld [vmem:[#allocation5 + $0x18] sm:$0xff]
    %v47 = vld [vmem:[#allocation5 + $0x20] sm:$0xff]
    %v48 = vld [vmem:[#allocation5 + $0x28] sm:$0xff]
    %v49 = vld [vmem:[#allocation5 + $0x30] sm:$0xff]
    %v50 = vld [vmem:[#allocation5 + $0x38] sm:$0xff]
    %v51 = vld [vmem:[#allocation5 + $0x40] sm:$0xff]
    %v52 = vld [vmem:[#allocation5 + $0x48] sm:$0xff]
    %v53 = vld [vmem:[#allocation5 + $0x50] sm:$0xff]
    %v54 = vld [vmem:[#allocation5 + $0x58] sm:$0xff]
    %v55 = vld [vmem:[#allocation5 + $0x60] sm:$0xff]
    %v56 = vld [vmem:[#allocation5 + $0x68] sm:$0xff]
    %v57 = vld [vmem:[#allocation5 + $0x70] sm:$0xff]
    %v58 = vld [vmem:[#allocation5 + $0x78] sm:$0xff]
    %v59 = vld [vmem:[#allocation5 + $0x80] sm:$0xff]
    %v60 = vld [vmem:[#allocation5 + $0x88] sm:$0xff]
    %v61 = vld [vmem:[#allocation5 + $0x90] sm:$0xff]
    %v62 = vld [vmem:[#allocation5 + $0x98] sm:$0xff]
    %v63 = vld [vmem:[#allocation5 + $0xa0] sm:$0xff]
    %v64 = vld [vmem:[#allocation5 + $0xa8] sm:$0xff]
    %v65 = vld [vmem:[#allocation5 + $0xb0] sm:$0xff]
    %v66 = vld [vmem:[#allocation5 + $0xb8] sm:$0xff]
    %v67 = vld [vmem:[#allocation5 + $0xc0] sm:$0xff]
    %v68 = vld [vmem:[#allocation5 + $0xc8] sm:$0xff]
    %v69 = vld [vmem:[#allocation5 + $0xd0] sm:$0xff]
    %v70 = vld [vmem:[#allocation5 + $0xd8] sm:$0xff]
    %v71 = vld [vmem:[#allocation5 + $0xe0] sm:$0xff]
    %v72 = vld [vmem:[#allocation5 + $0xe8] sm:$0xff]
    %v73 = vld [vmem:[#allocation5 + $0xf0] sm:$0xff]
    %v74 = vld [vmem:[#allocation5 + $0xf8] sm:$0xff]
    %v75 = vld [vmem:[#allocation5 + $0x100] sm:$0xff]
    %v76 = vld [vmem:[#allocation5 + $0x108] sm:$0xff]
    %v77 = vld [vmem:[#allocation5 + $0x110] sm:$0xff]
    %v78 = vld [vmem:[#allocation5 + $0x118] sm:$0xff]
    %v79 = vld [vmem:[#allocation5 + $0x120] sm:$0xff]
    %v80 = vld [vmem:[#allocation5 + $0x128] sm:$0xff]
    %v81 = vld [vmem:[#allocation5 + $0x130] sm:$0xff]
    %v82 = vld [vmem:[#allocation5 + $0x138] sm:$0xff]
    %v83 = vld [vmem:[#allocation5 + $0x140] sm:$0xff]
    %v84 = vld [vmem:[#allocation5 + $0x148] sm:$0xff]
    %v85 = vld [vmem:[#allocation5 + $0x150] sm:$0xff]
    %v86 = vld [vmem:[#allocation5 + $0x158] sm:$0xff]
    %v87 = vld [vmem:[#allocation5 + $0x160] sm:$0xff]
    %v88 = vld [vmem:[#allocation5 + $0x168] sm:$0xff]
    %v89 = vld [vmem:[#allocation5 + $0x170] sm:$0xff]
    %v90 = vld [vmem:[#allocation5 + $0x178] sm:$0xff]
    %v91 = vld [vmem:[#allocation5 + $0x180] sm:$0xff]
    %v92 = vld [vmem:[#allocation5 + $0x188] sm:$0xff]
    %v93 = vld [vmem:[#allocation5 + $0x190] sm:$0xff]
    %v94 = vld [vmem:[#allocation5 + $0x198] sm:$0xff]
    %v95 = vld [vmem:[#allocation5 + $0x1a0] sm:$0xff]
    %v96 = vld [vmem:[#allocation5 + $0x1a8] sm:$0xff]
    %v97 = vld [vmem:[#allocation5 + $0x1b0] sm:$0xff]
    %v98 = vld [vmem:[#allocation5 + $0x1b8] sm:$0xff]
    %v99 = vld [vmem:[#allocation5 + $0x1c0] sm:$0xff]
    %v100 = vld [vmem:[#allocation5 + $0x1c8] sm:$0xff]
    %v101 = vld [vmem:[#allocation5 + $0x1d0] sm:$0xff]
    %v102 = vld [vmem:[#allocation5 + $0x1d8] sm:$0xff]
    %v103 = vld [vmem:[#allocation5 + $0x1e0] sm:$0xff]
    %v104 = vld [vmem:[#allocation5 + $0x1e8] sm:$0xff]
    %v105 = vld [vmem:[#allocation5 + $0x1f0] sm:$0xff]
    %v106 = vld [vmem:[#allocation5 + $0x1f8] sm:$0xff]
    %v107 = vld [vmem:[%s2] sm:$0x3]
    %v109 = vlaneseq
    %v110 = vshrl.u32 %v109, 7
    %v111 = vsub.s32 0, %v110
    %v112 = vrot.slane %v107, %v111
    %v113 = vlaneseq
    %v114 = vshrl.u32 %v113, 7
    %v115 = vsub.s32 1, %v114
    %v116 = vrot.slane %v107, %v115
    %119 = vmatprep.subr.mxu0 %v44
    %120 = vmatpush1.msra.mxu0 %v43
    %121 = vmatprep.subr.mxu0 %v46
    %122 = vmatpush1.msra.mxu0 %v45
    %123 = vmatprep.subr.mxu0 %v48
    %124 = vmatpush1.msra.mxu0 %v47
    %125 = vmatprep.subr.mxu0 %v50
    %126 = vmatpush1.msra.mxu0 %v49
    %127 = vmatprep.subr.mxu0 %v52
    %128 = vmatpush1.msra.mxu0 %v51
    %129 = vmatprep.subr.mxu0 %v54
    %130 = vmatpush1.msra.mxu0 %v53
    %131 = vmatprep.subr.mxu0 %v56
    %132 = vmatpush1.msra.mxu0 %v55
    %133 = vmatprep.subr.mxu0 %v58
    %134 = vmatpush1.msra.mxu0 %v57
    %135 = vmatprep.subr.mxu0 %v60
    %136 = vmatpush1.msra.mxu0 %v59
    %137 = vmatprep.subr.mxu0 %v62
    %138 = vmatpush1.msra.mxu0 %v61
    %139 = vmatprep.subr.mxu0 %v64
    %140 = vmatpush1.msra.mxu0 %v63
    %141 = vmatprep.subr.mxu0 %v66
    %142 = vmatpush1.msra.mxu0 %v65
    %143 = vmatprep.subr.mxu0 %v68
    %144 = vmatpush1.msra.mxu0 %v67
    %145 = vmatprep.subr.mxu0 %v70
    %146 = vmatpush1.msra.mxu0 %v69
    %147 = vmatprep.subr.mxu0 %v72
    %148 = vmatpush1.msra.mxu0 %v71
    %149 = vmatprep.subr.mxu0 %v74
    %150 = vmatpush1.msra.mxu0 %v73
    %151 = vmatprep.subr.mxu0 %v76
    %152 = vmatpush1.msra.mxu0 %v75
    %153 = vmatprep.subr.mxu0 %v78
    %154 = vmatpush1.msra.mxu0 %v77
    %155 = vmatprep.subr.mxu0 %v80
    %156 = vmatpush1.msra.mxu0 %v79
    %157 = vmatprep.subr.mxu0 %v82
    %158 = vmatpush1.msra.mxu0 %v81
    %159 = vmatprep.subr.mxu0 %v84
    %160 = vmatpush1.msra.mxu0 %v83
    %161 = vmatprep.subr.mxu0 %v86
    %162 = vmatpush1.msra.mxu0 %v85
    %163 = vmatprep.subr.mxu0 %v88
    %164 = vmatpush1.msra.mxu0 %v87
    %165 = vmatprep.subr.mxu0 %v90
    %166 = vmatpush1.msra.mxu0 %v89
    %167 = vmatprep.subr.mxu0 %v92
    %168 = vmatpush1.msra.mxu0 %v91
    %169 = vmatprep.subr.mxu0 %v94
    %170 = vmatpush1.msra.mxu0 %v93
    %171 = vmatprep.subr.mxu0 %v96
    %172 = vmatpush1.msra.mxu0 %v95
    %173 = vmatprep.subr.mxu0 %v98
    %174 = vmatpush1.msra.mxu0 %v97
    %175 = vmatprep.subr.mxu0 %v100
    %176 = vmatpush1.msra.mxu0 %v99
    %177 = vmatprep.subr.mxu0 %v102
    %178 = vmatpush1.msra.mxu0 %v101
    %179 = vmatprep.subr.mxu0 %v104
    %180 = vmatpush1.msra.mxu0 %v103
    %181 = vmatprep.subr.mxu0 %v106
    %182 = vmatpush1.msra.mxu0 %v105
    %183 = vmatprep.mubr.f32.mxu0 %v42
    %184 = vmatmul.mubr.f32.gmra.mrb[0].mxu0 %v41
    %v185 = vpop.f32.mrb[0].mxu0
    %v186 = vadd.f32 %v112, %v185
    %v187 = vpop.f32.mrb[0].mxu0
    %v188 = vadd.f32 %v116, %v187
    %189 = vdwg.mxu0
    %190 = vst [vmem:[#allocation7] sm:$0xff] %v186
    %vm191 = vcmask 1039360
    %192 = vst.msk [vmem:[#allocation7 + $0x8] sm:$0xff] %vm191, %v188
    // Predicated region
    $region22: #{tpu_custom_call.1} parent=1 // pred_check
      _
    $region23: #{tpu_custom_call.1} parent=1 // pred_check_branch
      %194 = sbr.rel (0) target = $region25
    $region24: #{tpu_custom_call.1} parent=1 // pred_region
      %s196 = ssub.s32 256, 256
      %197 = vsyncadd [#allocation4], %s196
      %s199 = sshll.u32 [#allocation7], 4
      %s200 = int_to_ptr.vmem [resolvable:$true] %s199
      %202 = dma.vmem_to_hbm [thread:$0]  %s200, 256, %s3, [#allocation4]
    $region25: #{tpu_custom_call.1} parent=1 // pred_fallthru
      _
    // Predicated region
    $region26: #{tpu_custom_call.1} parent=1 // pred_check
      _
    $region27: #{tpu_custom_call.1} parent=1 // pred_check_branch
      %204 = sbr.rel (0) target = $region29
    $region28: #{tpu_custom_call.1} parent=1 // pred_region
      %205 = dma.done [#allocation4], 256
    $region29: #{tpu_custom_call.1} parent=1 // pred_fallthru
      _
    %206 = vsyncpa [#allocation3], 1
    %207 = vsyncpa [#allocation6], 1
    %208 = vsyncpa [#allocation4], 1

</llo_original>
